<compile_context>
chip_gen: v7x
topology: tpu7x:2x2x1
jax: 0.10.0
libtpu: 0.0.40
codegen_flags: <defaults>
</compile_context>

<pallas_src>
import jax
import jax.numpy as jnp
from jax import lax
from jax.experimental import pallas as pl
from jax.experimental.pallas import tpu as pltpu

IN_FEATURES = 10
OUT_FEATURES = 10
TILE_B_MAX = 4096  # rows per batch tile (amortizes ~0.35 us/step, fits VMEM easily)


def linear_kernel(x_ref, w_ref, b_ref, o_ref):
    """One batch tile of y = x @ W + b.

    x_ref: (TB, F_in) activation tile
    w_ref: (F_in, F_out) weight, pre-transposed to (in, out) -> clean MXU feed
    b_ref: (1, F_out)   bias row
    o_ref: (TB, F_out)  output tile
    """
    o_ref[...] = (
        jnp.dot(x_ref[...], w_ref[...], preferred_element_type=jnp.float32)
        + b_ref[...]
    ).astype(o_ref.dtype)


def _linear_pallas(x, w_t, b_row, *, tile_b_max=TILE_B_MAX):
    """Batch-gridded Linear layer: (B, F_in) @ (F_in, F_out) + (1, F_out)."""
    B, f_in = x.shape
    f_out = w_t.shape[1]
    # Full-array tile when B is small (block == array satisfies layout rules);
    # otherwise 8-aligned tiles with a masked partial edge block.
    tile_b = B if B <= tile_b_max else tile_b_max
    grid = (pl.cdiv(B, tile_b),)

    return pl.pallas_call(
        linear_kernel,
        out_shape=jax.ShapeDtypeStruct((B, f_out), x.dtype),
        grid_spec=pltpu.PrefetchScalarGridSpec(
            num_scalar_prefetch=0,
            grid=grid,
            in_specs=[
                pl.BlockSpec((tile_b, f_in), lambda i: (i, 0)),   # x tile
                pl.BlockSpec((f_in, f_out), lambda i: (0, 0)),    # weight (resident)
                pl.BlockSpec((1, f_out), lambda i: (0, 0)),       # bias   (resident)
            ],
            out_specs=pl.BlockSpec((tile_b, f_out), lambda i: (i, 0)),
        ),
        compiler_params=pltpu.CompilerParams(
            dimension_semantics=("parallel",),  # batch tiles independent -> megacore OK
        ),
    )(x, w_t, b_row)


def prepare_params(w1, b1, w2, b2):
    """One-time parameter layout prep (mirrors nn.Module init).

    PyTorch nn.Linear stores W as (out, in); transpose once to (in, out) so the
    kernel contracts dim 1 of x with dim 0 of W (no per-call / per-invocation
    transpose anywhere).
    """
    w1_t = jnp.asarray(w1, jnp.float32).T
    w2_t = jnp.asarray(w2, jnp.float32).T
    b1_r = jnp.asarray(b1, jnp.float32).reshape(1, -1)
    b2_r = jnp.asarray(b2, jnp.float32).reshape(1, -1)
    return w1_t, b1_r, w2_t, b2_r


@jax.jit
def hybrid_forward(x, w1_t, b1_r, w2_t, b2_r):
    """y1 = fc1(x); if sum(y1) > 0: return fc2(y1) else return y1."""
    x = jnp.asarray(x, jnp.float32)
    y1 = _linear_pallas(x, w1_t, b1_r)          # fc1: batch-gridded MXU pass
    s = jnp.sum(y1)                             # global branch predicate
    return lax.cond(
        s > 0.0,
        lambda y: _linear_pallas(y, w2_t, b2_r),  # fc2 pass only when taken
        lambda y: y,                              # branch not taken: no fc2 work/DMA
        y1,
    )


def reference_forward(x, w1, b1, w2, b2):
    y1 = x @ w1.T + b1
    y2 = y1 @ w2.T + b2
    return jnp.where(jnp.sum(y1) > 0.0, y2, y1)


if __name__ == "__main__":
    key = jax.random.PRNGKey(0)
    kx, kw1, kb1, kw2, kb2 = jax.random.split(key, 5)

    B = 8  # small demo batch (sublane aligned); any B works via the batch grid
    bound = 1.0 / (IN_FEATURES ** 0.5)  # nn.Linear-style U(-1/sqrt(fan_in), +) init
    x = jax.random.normal(kx, (B, IN_FEATURES), dtype=jnp.float32)
    w1 = jax.random.uniform(kw1, (OUT_FEATURES, IN_FEATURES), jnp.float32, -bound, bound)
    b1 = jax.random.uniform(kb1, (OUT_FEATURES,), jnp.float32, -bound, bound)
    w2 = jax.random.uniform(kw2, (OUT_FEATURES, IN_FEATURES), jnp.float32, -bound, bound)
    b2 = jax.random.uniform(kb2, (OUT_FEATURES,), jnp.float32, -bound, bound)

    params = prepare_params(w1, b1, w2, b2)
    out = hybrid_forward(x, *params)
    jax.block_until_ready(out)

    ref = reference_forward(x, w1, b1, w2, b2)
    assert out.shape == (B, OUT_FEATURES)
    assert jnp.allclose(out, ref, atol=1e-5, rtol=1e-5)

    print("KERNEL_OK")
</pallas_src>

<mosaic_0001>
module attributes {stable_mosaic.version = 11 : i64} {
  func.func @linear_kernel(%arg0: i32, %arg1: memref<8x10xf32, #tpu.memory_space<vmem>>, %arg2: memref<10x10xf32, #tpu.memory_space<vmem>>, %arg3: memref<1x10xf32, #tpu.memory_space<vmem>>, %arg4: memref<8x10xf32, #tpu.memory_space<vmem>>) attributes {dimension_semantics = [#tpu.dimension_semantics<parallel>], iteration_bounds = array<i64: 1>, scalar_prefetch = 0 : i64, scratch_operands = 0 : i64, tpu.core_type = #tpu.core_type<tc>, window_params = [{transform_indices = @transform_0, window_bounds = array<i64: 8, 10>}, {pipeline_mode = #tpu.pipeline_mode<synchronous>, transform_indices = @transform_1, window_bounds = array<i64: 10, 10>}, {pipeline_mode = #tpu.pipeline_mode<synchronous>, transform_indices = @transform_2, window_bounds = array<i64: 1, 10>}, {transform_indices = @transform_3, window_bounds = array<i64: 8, 10>}]} {
    %c0 = arith.constant 0 : index
    %c0_0 = arith.constant 0 : index
    %0 = vector.load %arg1[%c0, %c0_0] : memref<8x10xf32, #tpu.memory_space<vmem>>, vector<8x10xf32>
    %c0_1 = arith.constant 0 : index
    %c0_2 = arith.constant 0 : index
    %1 = vector.load %arg2[%c0_1, %c0_2] : memref<10x10xf32, #tpu.memory_space<vmem>>, vector<10x10xf32>
    %cst = arith.constant dense<0.000000e+00> : vector<8x10xf32>
    %2 = tpu.matmul %0, %1, %cst {dimension_numbers = #tpu.dot_dimension_numbers<[1], [0], [0], [1], [0, 0, 1, 1], [], []>} : vector<8x10xf32>, vector<10x10xf32>, vector<8x10xf32> -> vector<8x10xf32>
    %c0_3 = arith.constant 0 : index
    %c0_4 = arith.constant 0 : index
    %3 = vector.load %arg3[%c0_3, %c0_4] : memref<1x10xf32, #tpu.memory_space<vmem>>, vector<1x10xf32>
    %4 = vector.broadcast %3 : vector<1x10xf32> to vector<8x10xf32>
    %5 = arith.addf %2, %4 : vector<8x10xf32>
    %c0_5 = arith.constant 0 : index
    %c0_6 = arith.constant 0 : index
    %6 = vector.load %arg4[%c0_5, %c0_6] : memref<8x10xf32, #tpu.memory_space<vmem>>, vector<8x10xf32>
    tpu.vector_store %arg4[%c0_5, %c0_6], %5 {strides = array<i32>} : memref<8x10xf32, #tpu.memory_space<vmem>>, vector<8x10xf32>,
    return
  }
  func.func @transform_0(%arg0: i32) -> (i32, i32) {
    %c0_i32 = arith.constant 0 : i32
    %c0_i32_0 = arith.constant 0 : i32
    return %arg0, %c0_i32 : i32, i32
  }
  func.func @transform_1(%arg0: i32) -> (i32, i32) {
    %c0_i32 = arith.constant 0 : i32
    %c0_i32_0 = arith.constant 0 : i32
    %c0_i32_1 = arith.constant 0 : i32
    return %c0_i32, %c0_i32_0 : i32, i32
  }
  func.func @transform_2(%arg0: i32) -> (i32, i32) {
    %c0_i32 = arith.constant 0 : i32
    %c0_i32_0 = arith.constant 0 : i32
    %c0_i32_1 = arith.constant 0 : i32
    return %c0_i32, %c0_i32_0 : i32, i32
  }
  func.func @transform_3(%arg0: i32) -> (i32, i32) {
    %c0_i32 = arith.constant 0 : i32
    %c0_i32_0 = arith.constant 0 : i32
    return %arg0, %c0_i32 : i32, i32
  }
}

module attributes {stable_mosaic.version = 11 : i64} {
  func.func @linear_kernel(%arg0: i32, %arg1: memref<8x10xf32, #tpu.memory_space<vmem>>, %arg2: memref<10x10xf32, #tpu.memory_space<vmem>>, %arg3: memref<1x10xf32, #tpu.memory_space<vmem>>, %arg4: memref<8x10xf32, #tpu.memory_space<vmem>>) attributes {dimension_semantics = [#tpu.dimension_semantics<parallel>], iteration_bounds = array<i64: 1>, scalar_prefetch = 0 : i64, scratch_operands = 0 : i64, tpu.core_type = #tpu.core_type<tc>, window_params = [{transform_indices = @transform_0, window_bounds = array<i64: 8, 10>}, {pipeline_mode = #tpu.pipeline_mode<synchronous>, transform_indices = @transform_1, window_bounds = array<i64: 10, 10>}, {pipeline_mode = #tpu.pipeline_mode<synchronous>, transform_indices = @transform_2, window_bounds = array<i64: 1, 10>}, {transform_indices = @transform_3, window_bounds = array<i64: 8, 10>}]} {
    %c0 = arith.constant 0 : index
    %c0_0 = arith.constant 0 : index
    %0 = vector.load %arg1[%c0, %c0_0] : memref<8x10xf32, #tpu.memory_space<vmem>>, vector<8x10xf32>
    %c0_1 = arith.constant 0 : index
    %c0_2 = arith.constant 0 : index
    %1 = vector.load %arg2[%c0_1, %c0_2] : memref<10x10xf32, #tpu.memory_space<vmem>>, vector<10x10xf32>
    %cst = arith.constant dense<0.000000e+00> : vector<8x10xf32>
    %2 = tpu.matmul %0, %1, %cst {dimension_numbers = #tpu.dot_dimension_numbers<[1], [0], [0], [1], [0, 0, 1, 1], [], []>} : vector<8x10xf32>, vector<10x10xf32>, vector<8x10xf32> -> vector<8x10xf32>
    %c0_3 = arith.constant 0 : index
    %c0_4 = arith.constant 0 : index
    %3 = vector.load %arg3[%c0_3, %c0_4] : memref<1x10xf32, #tpu.memory_space<vmem>>, vector<1x10xf32>
    %4 = vector.broadcast %3 : vector<1x10xf32> to vector<8x10xf32>
    %5 = arith.addf %2, %4 : vector<8x10xf32>
    %c0_5 = arith.constant 0 : index
    %c0_6 = arith.constant 0 : index
    %6 = vector.load %arg4[%c0_5, %c0_6] : memref<8x10xf32, #tpu.memory_space<vmem>>, vector<8x10xf32>
    tpu.vector_store %arg4[%c0_5, %c0_6], %5 {strides = array<i32>} : memref<8x10xf32, #tpu.memory_space<vmem>>, vector<8x10xf32>,
    return
  }
  func.func @transform_0(%arg0: i32) -> (i32, i32) {
    %c0_i32 = arith.constant 0 : i32
    %c0_i32_0 = arith.constant 0 : i32
    return %arg0, %c0_i32 : i32, i32
  }
  func.func @transform_1(%arg0: i32) -> (i32, i32) {
    %c0_i32 = arith.constant 0 : i32
    %c0_i32_0 = arith.constant 0 : i32
    %c0_i32_1 = arith.constant 0 : i32
    return %c0_i32, %c0_i32_0 : i32, i32
  }
  func.func @transform_2(%arg0: i32) -> (i32, i32) {
    %c0_i32 = arith.constant 0 : i32
    %c0_i32_0 = arith.constant 0 : i32
    %c0_i32_1 = arith.constant 0 : i32
    return %c0_i32, %c0_i32_0 : i32, i32
  }
  func.func @transform_3(%arg0: i32) -> (i32, i32) {
    %c0_i32 = arith.constant 0 : i32
    %c0_i32_0 = arith.constant 0 : i32
    return %arg0, %c0_i32 : i32, i32
  }
}

</mosaic_0001>

<llo_original>
// kernel: hybrid_forward.1
$region0: #{hybrid_forward.1}
  #allocation0 [shape = 'u32[]', space=smem, size = 0x4, offset = 0x4, fixed_abs, tag = 'smem constant byte address 0x4 - core index']
  #allocation1 [shape = 'u32[144,128]{1,0:T(1,128)}', space=vmem, size = 0x12000, scoped, tag = 'internal scratch']
  %s0 = inlined_call_operand.hbm [shape: f32[8,10], index: 0, kind: input, shape index: {}]
  %s1 = inlined_call_operand.hbm [shape: f32[10,10], index: 1, kind: input, shape index: {}]
  %s2 = inlined_call_operand.vmem [shape: f32[1,10], index: 2, kind: input, shape index: {}]
  %s3 = inlined_call_operand.vmem [shape: f32[8,10], index: 3, kind: output, shape index: {}]
  %s4 = sld [smem:[#allocation0]]
  $region30: #{hybrid_forward.1} parent=0
    _
  %s6 = ssub.s32 1, %s4
  %s7 = scalar_select 0, %s6, %s4
  $region1: #{hybrid_forward.1} parent=0
    #allocation2 [shape = 'u8[4096]{0}', space=vmem, size = 0x1000, scoped, tag = 'input window, operand 0, single buffered']
    #allocation3 [shape = 's32[1]{0}', space=sflag, size = 0x4, scoped, tag = 'scoped memory for hybrid_forward.1']
    #allocation4 [shape = 'u8[8192]{0}', space=vmem, size = 0x2000, scoped, tag = 'input window, operand 1, single buffered']
    #allocation5 [shape = 's32[1]{0}', space=sflag, size = 0x4, scoped, tag = 'scoped memory for hybrid_forward.1']
    %8 = vsyncpa [#allocation3], 0
    %9 = vsyncpa [#allocation5], 0
    // Predicated region
    $region2: #{hybrid_forward.1} parent=1 // pred_check
      _
    $region3: #{hybrid_forward.1} parent=1 // pred_check_branch
      %11 = sbr.rel (0) target = $region5
    $region4: #{hybrid_forward.1} parent=1 // pred_region
      %s13 = ssub.s32 128, 128
      %14 = vsyncadd [#allocation3], %s13
      %s16 = sshll.u32 [#allocation2], 4
      %s17 = int_to_ptr.vmem [resolvable:$true] %s16
      %19 = dma.hbm_to_vmem [thread:$0]  %s0, 128, %s17, [#allocation3]
    $region5: #{hybrid_forward.1} parent=1 // pred_fallthru
      _
    // Predicated region
    $region6: #{hybrid_forward.1} parent=1 // pred_check
      _
    $region7: #{hybrid_forward.1} parent=1 // pred_check_branch
      %21 = sbr.rel (0) target = $region9
    $region8: #{hybrid_forward.1} parent=1 // pred_region
      %s23 = ssub.s32 256, 256
      %24 = vsyncadd [#allocation5], %s23
      %s25 = sshll.u32 [#allocation4], 4
      %s26 = int_to_ptr.vmem [resolvable:$true] %s25
      %31 = dma.hbm_to_vmem [thread:$0]  %s1, 256, %s26, [#allocation5], 128, 128, 8
    $region9: #{hybrid_forward.1} parent=1 // pred_fallthru
      _
    // Predicated region
    $region10: #{hybrid_forward.1} parent=1 // pred_check
      _
    $region11: #{hybrid_forward.1} parent=1 // pred_check_branch
      %33 = sbr.rel (0) target = $region13
    $region12: #{hybrid_forward.1} parent=1 // pred_region
      _
    $region13: #{hybrid_forward.1} parent=1 // pred_fallthru
      _
    // Predicated region
    $region14: #{hybrid_forward.1} parent=1 // pred_check
      _
    $region15: #{hybrid_forward.1} parent=1 // pred_check_branch
      %35 = sbr.rel (0) target = $region17
    $region16: #{hybrid_forward.1} parent=1 // pred_region
      %36 = dma.done [#allocation3], 128
    $region17: #{hybrid_forward.1} parent=1 // pred_fallthru
      _
    // Predicated region
    $region18: #{hybrid_forward.1} parent=1 // pred_check
      _
    $region19: #{hybrid_forward.1} parent=1 // pred_check_branch
      %38 = sbr.rel (0) target = $region21
    $region20: #{hybrid_forward.1} parent=1 // pred_region
      %39 = dma.done [#allocation5], 256
    $region21: #{hybrid_forward.1} parent=1 // pred_fallthru
      _
    %v40 = vld [vmem:[#allocation2] sm:$0xff]
    %v41 = vld [vmem:[#allocation4] sm:$0xff]
    %v42 = vld [vmem:[#allocation4 + $0x8] sm:$0x3]
    %v43 = vld [vmem:[%s2] sm:$0x1]
    %v45 = vlaneseq
    %v46 = vshrl.u32 %v45, 7
    %v47 = vsub.s32 0, %v46
    %v48 = vrot.slane %v43, %v47
    %vm50 = vcmask 80896
    %v52 = vsel %vm50, %v40, 0
    %vm54 = vcmask 1041408
    %v56 = vsel %vm54, %v42, 0
    %58 = vmatprep.subr.mxu0 0.0
    %59 = vmatpush1.msra.mxu0 %v41
    %60 = vmatprep.subr.mxu0 0.0
    %61 = vmatpush1.msra.mxu0 %v56
    %62 = vmatprep.subr.mxu0 0.0
    %63 = vmatpush1.msra.mxu0 0.0
    %64 = vmatprep.subr.mxu0 0.0
    %65 = vmatpush1.msra.mxu0 0.0
    %66 = vmatprep.subr.mxu0 0.0
    %67 = vmatpush1.msra.mxu0 0.0
    %68 = vmatprep.subr.mxu0 0.0
    %69 = vmatpush1.msra.mxu0 0.0
    %70 = vmatprep.subr.mxu0 0.0
    %71 = vmatpush1.msra.mxu0 0.0
    %72 = vmatprep.subr.mxu0 0.0
    %73 = vmatpush1.msra.mxu0 0.0
    %74 = vmatprep.subr.mxu0 0.0
    %75 = vmatpush1.msra.mxu0 0.0
    %76 = vmatprep.subr.mxu0 0.0
    %77 = vmatpush1.msra.mxu0 0.0
    %78 = vmatprep.subr.mxu0 0.0
    %79 = vmatpush1.msra.mxu0 0.0
    %80 = vmatprep.subr.mxu0 0.0
    %81 = vmatpush1.msra.mxu0 0.0
    %82 = vmatprep.subr.mxu0 0.0
    %83 = vmatpush1.msra.mxu0 0.0
    %84 = vmatprep.subr.mxu0 0.0
    %85 = vmatpush1.msra.mxu0 0.0
    %86 = vmatprep.subr.mxu0 0.0
    %87 = vmatpush1.msra.mxu0 0.0
    %88 = vmatprep.subr.mxu0 0.0
    %89 = vmatpush1.msra.mxu0 0.0
    %90 = vmatprep.subr.mxu0 0.0
    %91 = vmatpush1.msra.mxu0 0.0
    %92 = vmatprep.subr.mxu0 0.0
    %93 = vmatpush1.msra.mxu0 0.0
    %94 = vmatprep.subr.mxu0 0.0
    %95 = vmatpush1.msra.mxu0 0.0
    %96 = vmatprep.subr.mxu0 0.0
    %97 = vmatpush1.msra.mxu0 0.0
    %98 = vmatprep.subr.mxu0 0.0
    %99 = vmatpush1.msra.mxu0 0.0
    %100 = vmatprep.subr.mxu0 0.0
    %101 = vmatpush1.msra.mxu0 0.0
    %102 = vmatprep.subr.mxu0 0.0
    %103 = vmatpush1.msra.mxu0 0.0
    %104 = vmatprep.subr.mxu0 0.0
    %105 = vmatpush1.msra.mxu0 0.0
    %106 = vmatprep.subr.mxu0 0.0
    %107 = vmatpush1.msra.mxu0 0.0
    %108 = vmatprep.subr.mxu0 0.0
    %109 = vmatpush1.msra.mxu0 0.0
    %110 = vmatprep.subr.mxu0 0.0
    %111 = vmatpush1.msra.mxu0 0.0
    %112 = vmatprep.subr.mxu0 0.0
    %113 = vmatpush1.msra.mxu0 0.0
    %114 = vmatprep.subr.mxu0 0.0
    %115 = vmatpush1.msra.mxu0 0.0
    %116 = vmatprep.subr.mxu0 0.0
    %117 = vmatpush1.msra.mxu0 0.0
    %118 = vmatprep.subr.mxu0 0.0
    %119 = vmatpush1.msra.mxu0 0.0
    %120 = vmatprep.subr.mxu0 0.0
    %121 = vmatpush1.msra.mxu0 0.0
    %122 = vmatprep.mubr.f32.mxu0 0.0
    %123 = vmatmul.mubr.f32.gmra.mrb[0].mxu0 %v52
    %v124 = vpop.f32.mrb[0].mxu0
    %v125 = vadd.f32 %v48, %v124
    %v126 = vpop.f32.mrb[0].mxu0
    %127 = vdwg.mxu0
    %128 = vst.msk [vmem:[%s3] sm:$0xff] %vm50, %v125
    // Predicated region
    $region22: #{hybrid_forward.1} parent=1 // pred_check
      _
    $region23: #{hybrid_forward.1} parent=1 // pred_check_branch
      %130 = sbr.rel (0) target = $region25
    $region24: #{hybrid_forward.1} parent=1 // pred_region
      _
    $region25: #{hybrid_forward.1} parent=1 // pred_fallthru
      _
    // Predicated region
    $region26: #{hybrid_forward.1} parent=1 // pred_check
      _
    $region27: #{hybrid_forward.1} parent=1 // pred_check_branch
      %132 = sbr.rel (0) target = $region29
    $region28: #{hybrid_forward.1} parent=1 // pred_region
      _
    $region29: #{hybrid_forward.1} parent=1 // pred_fallthru
      _
    %133 = vsyncpa [#allocation3], 1
    %134 = vsyncpa [#allocation5], 1

// kernel: branch_1_fun.1
$region0: #{branch_1_fun.1}
  #allocation0 [shape = 'u32[]', space=smem, size = 0x4, offset = 0x4, fixed_abs, tag = 'smem constant byte address 0x4 - core index']
  #allocation1 [shape = 'u32[144,128]{1,0:T(1,128)}', space=vmem, size = 0x12000, scoped, tag = 'internal scratch']
  %s0 = inlined_call_operand.vmem [shape: f32[8,10], index: 0, kind: input, shape index: {}]
  %s1 = inlined_call_operand.vmem [shape: f32[10,10], index: 1, kind: input, shape index: {}]
  %s2 = inlined_call_operand.vmem [shape: f32[1,10], index: 2, kind: input, shape index: {}]
  %s3 = inlined_call_operand.hbm [shape: f32[8,10], index: 3, kind: output, shape index: {}]
  %s4 = sld [smem:[#allocation0]]
  $region22: #{branch_1_fun.1} parent=0
    _
  %s6 = ssub.s32 1, %s4
  %s7 = scalar_select 0, %s6, %s4
  $region1: #{branch_1_fun.1} parent=0
    #allocation2 [shape = 'u8[4096]{0}', space=vmem, size = 0x1000, scoped, tag = 'output window, operand 0, single buffered']
    #allocation3 [shape = 's32[1]{0}', space=sflag, size = 0x4, scoped, tag = 'scoped memory for branch_1_fun.1']
    %8 = vsyncpa [#allocation3], 0
    // Predicated region
    $region2: #{branch_1_fun.1} parent=1 // pred_check
      _
    $region3: #{branch_1_fun.1} parent=1 // pred_check_branch
      %10 = sbr.rel (0) target = $region5
    $region4: #{branch_1_fun.1} parent=1 // pred_region
      _
    $region5: #{branch_1_fun.1} parent=1 // pred_fallthru
      _
    // Predicated region
    $region6: #{branch_1_fun.1} parent=1 // pred_check
      _
    $region7: #{branch_1_fun.1} parent=1 // pred_check_branch
      %12 = sbr.rel (0) target = $region9
    $region8: #{branch_1_fun.1} parent=1 // pred_region
      _
    $region9: #{branch_1_fun.1} parent=1 // pred_fallthru
      _
    // Predicated region
    $region10: #{branch_1_fun.1} parent=1 // pred_check
      _
    $region11: #{branch_1_fun.1} parent=1 // pred_check_branch
      %14 = sbr.rel (0) target = $region13
    $region12: #{branch_1_fun.1} parent=1 // pred_region
      _
    $region13: #{branch_1_fun.1} parent=1 // pred_fallthru
      _
    %v15 = vld [vmem:[%s0] sm:$0xff]
    %v16 = vld [vmem:[%s1] sm:$0xff]
    %v17 = vld [vmem:[%s1 + $0x8] sm:$0x3]
    %v18 = vld [vmem:[%s2] sm:$0x1]
    %v20 = vlaneseq
    %v21 = vshrl.u32 %v20, 7
    %v22 = vsub.s32 0, %v21
    %v23 = vrot.slane %v18, %v22
    %vm25 = vcmask 80896
    %v27 = vsel %vm25, %v15, 0
    %vm29 = vcmask 1041408
    %v31 = vsel %vm29, %v17, 0
    %33 = vmatprep.subr.mxu0 0.0
    %34 = vmatpush1.msra.mxu0 %v16
    %35 = vmatprep.subr.mxu0 0.0
    %36 = vmatpush1.msra.mxu0 %v31
    %37 = vmatprep.subr.mxu0 0.0
    %38 = vmatpush1.msra.mxu0 0.0
    %39 = vmatprep.subr.mxu0 0.0
    %40 = vmatpush1.msra.mxu0 0.0
    %41 = vmatprep.subr.mxu0 0.0
    %42 = vmatpush1.msra.mxu0 0.0
    %43 = vmatprep.subr.mxu0 0.0
    %44 = vmatpush1.msra.mxu0 0.0
    %45 = vmatprep.subr.mxu0 0.0
    %46 = vmatpush1.msra.mxu0 0.0
    %47 = vmatprep.subr.mxu0 0.0
    %48 = vmatpush1.msra.mxu0 0.0
    %49 = vmatprep.subr.mxu0 0.0
    %50 = vmatpush1.msra.mxu0 0.0
    %51 = vmatprep.subr.mxu0 0.0
    %52 = vmatpush1.msra.mxu0 0.0
    %53 = vmatprep.subr.mxu0 0.0
    %54 = vmatpush1.msra.mxu0 0.0
    %55 = vmatprep.subr.mxu0 0.0
    %56 = vmatpush1.msra.mxu0 0.0
    %57 = vmatprep.subr.mxu0 0.0
    %58 = vmatpush1.msra.mxu0 0.0
    %59 = vmatprep.subr.mxu0 0.0
    %60 = vmatpush1.msra.mxu0 0.0
    %61 = vmatprep.subr.mxu0 0.0
    %62 = vmatpush1.msra.mxu0 0.0
    %63 = vmatprep.subr.mxu0 0.0
    %64 = vmatpush1.msra.mxu0 0.0
    %65 = vmatprep.subr.mxu0 0.0
    %66 = vmatpush1.msra.mxu0 0.0
    %67 = vmatprep.subr.mxu0 0.0
    %68 = vmatpush1.msra.mxu0 0.0
    %69 = vmatprep.subr.mxu0 0.0
    %70 = vmatpush1.msra.mxu0 0.0
    %71 = vmatprep.subr.mxu0 0.0
    %72 = vmatpush1.msra.mxu0 0.0
    %73 = vmatprep.subr.mxu0 0.0
    %74 = vmatpush1.msra.mxu0 0.0
    %75 = vmatprep.subr.mxu0 0.0
    %76 = vmatpush1.msra.mxu0 0.0
    %77 = vmatprep.subr.mxu0 0.0
    %78 = vmatpush1.msra.mxu0 0.0
    %79 = vmatprep.subr.mxu0 0.0
    %80 = vmatpush1.msra.mxu0 0.0
    %81 = vmatprep.subr.mxu0 0.0
    %82 = vmatpush1.msra.mxu0 0.0
    %83 = vmatprep.subr.mxu0 0.0
    %84 = vmatpush1.msra.mxu0 0.0
    %85 = vmatprep.subr.mxu0 0.0
    %86 = vmatpush1.msra.mxu0 0.0
    %87 = vmatprep.subr.mxu0 0.0
    %88 = vmatpush1.msra.mxu0 0.0
    %89 = vmatprep.subr.mxu0 0.0
    %90 = vmatpush1.msra.mxu0 0.0
    %91 = vmatprep.subr.mxu0 0.0
    %92 = vmatpush1.msra.mxu0 0.0
    %93 = vmatprep.subr.mxu0 0.0
    %94 = vmatpush1.msra.mxu0 0.0
    %95 = vmatprep.subr.mxu0 0.0
    %96 = vmatpush1.msra.mxu0 0.0
    %97 = vmatprep.mubr.f32.mxu0 0.0
    %98 = vmatmul.mubr.f32.gmra.mrb[0].mxu0 %v27
    %v99 = vpop.f32.mrb[0].mxu0
    %v100 = vadd.f32 %v23, %v99
    %v101 = vpop.f32.mrb[0].mxu0
    %102 = vdwg.mxu0
    %103 = vst.msk [vmem:[#allocation2] sm:$0xff] %vm25, %v100
    // Predicated region
    $region14: #{branch_1_fun.1} parent=1 // pred_check
      _
    $region15: #{branch_1_fun.1} parent=1 // pred_check_branch
      %105 = sbr.rel (0) target = $region17
    $region16: #{branch_1_fun.1} parent=1 // pred_region
      %s107 = ssub.s32 128, 128
      %108 = vsyncadd [#allocation3], %s107
      %s110 = sshll.u32 [#allocation2], 4
      %s111 = int_to_ptr.vmem [resolvable:$true] %s110
      %113 = dma.vmem_to_hbm [thread:$0]  %s111, 128, %s3, [#allocation3]
    $region17: #{branch_1_fun.1} parent=1 // pred_fallthru
      _
    // Predicated region
    $region18: #{branch_1_fun.1} parent=1 // pred_check
      _
    $region19: #{branch_1_fun.1} parent=1 // pred_check_branch
      %115 = sbr.rel (0) target = $region21
    $region20: #{branch_1_fun.1} parent=1 // pred_region
      %116 = dma.done [#allocation3], 128
    $region21: #{branch_1_fun.1} parent=1 // pred_fallthru
      _
    %117 = vsyncpa [#allocation3], 1

</llo_original>
